<compile_context>
chip_gen: v7x
topology: tpu7x:2x2x1
jax: 0.10.0
libtpu: 0.0.40
codegen_flags: <defaults>
</compile_context>

<pallas_src>
import functools

import jax
import jax.numpy as jnp
from jax.experimental import pallas as pl
from jax.experimental.pallas import tpu as pltpu

_LANES = 128
_SUBLANES = 8
_NEG_INF = -1e30


def _round_up(x, m):
    return ((x + m - 1) // m) * m


def actor_kernel(x_ref, w_ref, b_ref, o_ref, *, in_size, in_pad, n_cols):
    """One batch tile: x (TB, in_size) -> probs (TB, n_cols); lanes >= out_size are 0."""

    def dense(h, row_off, rows, layer, relu):
        w = w_ref[pl.ds(row_off, rows), :]            # static, 8-aligned row slice
        b = b_ref[pl.ds(_SUBLANES * layer, 1), :]     # (1, n_cols)
        acc = jnp.dot(h, w, preferred_element_type=jnp.float32) + b
        return jnp.maximum(acc, 0.0) if relu else acc

    h = dense(x_ref[...], 0, in_size, 0, relu=True)
    h = dense(h, in_pad, n_cols, 1, relu=True)
    h = dense(h, in_pad + n_cols, n_cols, 2, relu=True)
    logits = dense(h, in_pad + 2 * n_cols, n_cols, 3, relu=False)

    # Numerically-stable softmax over the lane-dense (128-wide) last dim.
    m = jnp.max(logits, axis=-1, keepdims=True)
    e = jnp.exp(logits - m)                           # padded (-1e30) lanes -> exactly 0
    denom = jnp.sum(e, axis=-1, keepdims=True)
    # Exact divide so the returned Categorical probs sum to 1 (approx reciprocal
    # previously drifted the row-sum by >1e-3).
    o_ref[...] = (e / denom).astype(o_ref.dtype)


def prepare_params(params):
    """One-time param prep, hoisted out of the per-step hot path.

    Packs the 4 [out, in] PyTorch weights into one [in_pad + 3*n_cols, n_cols] f32
    buffer (transposed, hidden/output widths zero-padded to 128 lanes) and the 4
    biases into one [32, n_cols] buffer (one bias per 8-sublane-aligned row).
    Padded output lanes of layer 4 get a -1e30 bias -> softmax prob exactly 0.
    """
    (w1, b1), (w2, b2), (w3, b3), (w4, b4) = params
    h1, in_size = w1.shape
    h2, h3, out_size = w2.shape[0], w3.shape[0], w4.shape[0]

    n_cols = _round_up(max(h1, h2, h3, out_size), _LANES)
    in_pad = _round_up(in_size, _SUBLANES)

    wp = jnp.zeros((in_pad + 3 * n_cols, n_cols), jnp.float32)
    wp = wp.at[0:in_size, 0:h1].set(w1.T)
    wp = wp.at[in_pad:in_pad + h1, 0:h2].set(w2.T)
    wp = wp.at[in_pad + n_cols:in_pad + n_cols + h2, 0:h3].set(w3.T)
    wp = wp.at[in_pad + 2 * n_cols:in_pad + 2 * n_cols + h3, 0:out_size].set(w4.T)

    bp = jnp.zeros((4 * _SUBLANES, n_cols), jnp.float32)
    bp = bp.at[0, 0:h1].set(b1)
    bp = bp.at[_SUBLANES, 0:h2].set(b2)
    bp = bp.at[2 * _SUBLANES, 0:h3].set(b3)
    bp = bp.at[3 * _SUBLANES, :].set(
        jnp.full((n_cols,), _NEG_INF, jnp.float32).at[0:out_size].set(b4))

    meta = dict(in_size=in_size, in_pad=in_pad, n_cols=n_cols, out_size=out_size)
    return (wp, bp), meta


@functools.partial(jax.jit,
                   static_argnames=("in_size", "in_pad", "n_cols", "out_size", "tb"))
def actor_forward(state, wp, bp, *, in_size, in_pad, n_cols, out_size, tb=1024):
    """state: [B, input_size] f32 -> probs: [B, out_size] f32."""
    B = state.shape[0]

    # Batch tile: multiple of 8 sublanes.  For B > tb, pick TB so the grid has >= 2
    # balanced tiles -> the "parallel" batch axis actually splits across v7x's 2 TCs.
    if B > tb:
        TB = min(tb, _round_up(pl.cdiv(B, 2), _SUBLANES))
    else:
        TB = _round_up(B, _SUBLANES)
    nb = pl.cdiv(B, TB)   # boundary block (if any) is masked by Pallas; no jnp.pad.

    kernel = functools.partial(actor_kernel,
                               in_size=in_size, in_pad=in_pad, n_cols=n_cols)
    resident = lambda i: (0, 0)   # same block every step -> packed params stay in VMEM

    grid_spec = pltpu.PrefetchScalarGridSpec(
        num_scalar_prefetch=0,
        grid=(nb,),
        in_specs=[
            pl.BlockSpec((TB, in_size), lambda i: (i, 0)),
            pl.BlockSpec(wp.shape, resident),
            pl.BlockSpec(bp.shape, resident),
        ],
        out_specs=pl.BlockSpec((TB, n_cols), lambda i: (i, 0)),
    )

    probs_pad = pl.pallas_call(
        kernel,
        out_shape=jax.ShapeDtypeStruct((B, n_cols), jnp.float32),
        grid_spec=grid_spec,
        compiler_params=pltpu.CompilerParams(
            dimension_semantics=("parallel",)),   # dual-TC sharding on v7x
    )(state, wp, bp)

    return probs_pad[:, :out_size]


def init_linear(key, in_f, out_f):
    """Deterministic PyTorch-like init: U(-1/sqrt(in), 1/sqrt(in))."""
    kw, kb = jax.random.split(key)
    bound = 1.0 / jnp.sqrt(jnp.float32(in_f))
    w = jax.random.uniform(kw, (out_f, in_f), jnp.float32, -bound, bound)
    b = jax.random.uniform(kb, (out_f,), jnp.float32, -bound, bound)
    return w, b


def reference_forward(state, params):
    (w1, b1), (w2, b2), (w3, b3), (w4, b4) = params
    h = jnp.maximum(state @ w1.T + b1, 0.0)
    h = jnp.maximum(h @ w2.T + b2, 0.0)
    h = jnp.maximum(h @ w3.T + b3, 0.0)
    logits = h @ w4.T + b4
    return jax.nn.softmax(logits, axis=-1)


if __name__ == "__main__":
    # Small shapes consistent with the MLP: input=16, h1=h2=h3=32, out=4
    B, input_size, h1, h2, h3, output_size = 8, 16, 32, 32, 32, 4

    key = jax.random.PRNGKey(0)
    k_state, k_mid, k_big, k1, k2, k3, k4 = jax.random.split(key, 7)

    params = (
        init_linear(k1, input_size, h1),
        init_linear(k2, h1, h2),
        init_linear(k3, h2, h3),
        init_linear(k4, h3, output_size),
    )
    # One-time param prep (transpose + pad + pack), hoisted out of the hot path.
    (wp, bp), meta = prepare_params(params)

    # Small single-tile case.
    state = jax.random.normal(k_state, (B, input_size), jnp.float32)
    probs = jax.block_until_ready(actor_forward(state, wp, bp, **meta))
    expected = reference_forward(state, params)
    assert probs.shape == (B, output_size)
    assert jnp.allclose(probs, expected, atol=1e-3, rtol=1e-3), \
        float(jnp.max(jnp.abs(probs - expected)))
    assert jnp.allclose(jnp.sum(probs, axis=-1), 1.0, atol=1e-3)

    # Batch not a multiple of the sublane tile: boundary block masked, no wrapper pad.
    state_mid = jax.random.normal(k_mid, (100, input_size), jnp.float32)
    probs_mid = jax.block_until_ready(actor_forward(state_mid, wp, bp, **meta))
    expected_mid = reference_forward(state_mid, params)
    assert probs_mid.shape == (100, output_size)
    assert jnp.allclose(probs_mid, expected_mid, atol=1e-3, rtol=1e-3)
    assert jnp.allclose(jnp.sum(probs_mid, axis=-1), 1.0, atol=1e-3)

    # Large rollout batch: B > tb -> 2 big tiles, "parallel" axis spans both v7x TCs.
    state_big = jax.random.normal(k_big, (2048, input_size), jnp.float32)
    probs_big = jax.block_until_ready(actor_forward(state_big, wp, bp, **meta))
    expected_big = reference_forward(state_big, params)
    assert jnp.allclose(probs_big, expected_big, atol=1e-3, rtol=1e-3)
    assert jnp.allclose(jnp.sum(probs_big, axis=-1), 1.0, atol=1e-3)

    print("KERNEL_OK")
</pallas_src>

<mosaic_0001>
module attributes {stable_mosaic.version = 11 : i64} {
  func.func @actor_kernel(%arg0: i32, %arg1: memref<8x16xf32, #tpu.memory_space<vmem>>, %arg2: memref<400x128xf32, #tpu.memory_space<vmem>>, %arg3: memref<32x128xf32, #tpu.memory_space<vmem>>, %arg4: memref<8x128xf32, #tpu.memory_space<vmem>>) attributes {dimension_semantics = [#tpu.dimension_semantics<parallel>], iteration_bounds = array<i64: 1>, scalar_prefetch = 0 : i64, scratch_operands = 0 : i64, tpu.core_type = #tpu.core_type<tc>, window_params = [{transform_indices = @transform_0, window_bounds = array<i64: 8, 16>}, {pipeline_mode = #tpu.pipeline_mode<synchronous>, transform_indices = @transform_1, window_bounds = array<i64: 400, 128>}, {pipeline_mode = #tpu.pipeline_mode<synchronous>, transform_indices = @transform_2, window_bounds = array<i64: 32, 128>}, {transform_indices = @transform_3, window_bounds = array<i64: 8, 128>}]} {
    %c0 = arith.constant 0 : index
    %c0_0 = arith.constant 0 : index
    %0 = vector.load %arg1[%c0, %c0_0] : memref<8x16xf32, #tpu.memory_space<vmem>>, vector<8x16xf32>
    %c0_1 = arith.constant 0 : index
    %c0_2 = arith.constant 0 : index
    %1 = vector.load %arg2[%c0_1, %c0_2] : memref<400x128xf32, #tpu.memory_space<vmem>>, vector<16x128xf32>
    %c0_3 = arith.constant 0 : index
    %c0_4 = arith.constant 0 : index
    %2 = vector.load %arg3[%c0_3, %c0_4] : memref<32x128xf32, #tpu.memory_space<vmem>>, vector<1x128xf32>
    %cst = arith.constant dense<0.000000e+00> : vector<8x128xf32>
    %3 = tpu.matmul %0, %1, %cst {dimension_numbers = #tpu.dot_dimension_numbers<[1], [0], [0], [1], [0, 0, 1, 1], [], []>} : vector<8x16xf32>, vector<16x128xf32>, vector<8x128xf32> -> vector<8x128xf32>
    %4 = vector.broadcast %2 : vector<1x128xf32> to vector<8x128xf32>
    %5 = arith.addf %3, %4 : vector<8x128xf32>
    %cst_5 = arith.constant 0.000000e+00 : f32
    %6 = vector.broadcast %cst_5 : f32 to vector<8x128xf32>
    %7 = arith.maximumf %5, %6 : vector<8x128xf32>
    %c16 = arith.constant 16 : index
    %c0_6 = arith.constant 0 : index
    %8 = vector.load %arg2[%c16, %c0_6] : memref<400x128xf32, #tpu.memory_space<vmem>>, vector<128x128xf32>
    %c8 = arith.constant 8 : index
    %c0_7 = arith.constant 0 : index
    %9 = vector.load %arg3[%c8, %c0_7] : memref<32x128xf32, #tpu.memory_space<vmem>>, vector<1x128xf32>
    %cst_8 = arith.constant dense<0.000000e+00> : vector<8x128xf32>
    %10 = tpu.matmul %7, %8, %cst_8 {dimension_numbers = #tpu.dot_dimension_numbers<[1], [0], [0], [1], [0, 0, 1, 1], [], []>} : vector<8x128xf32>, vector<128x128xf32>, vector<8x128xf32> -> vector<8x128xf32>
    %11 = vector.broadcast %9 : vector<1x128xf32> to vector<8x128xf32>
    %12 = arith.addf %10, %11 : vector<8x128xf32>
    %cst_9 = arith.constant 0.000000e+00 : f32
    %13 = vector.broadcast %cst_9 : f32 to vector<8x128xf32>
    %14 = arith.maximumf %12, %13 : vector<8x128xf32>
    %c144 = arith.constant 144 : index
    %c0_10 = arith.constant 0 : index
    %15 = vector.load %arg2[%c144, %c0_10] : memref<400x128xf32, #tpu.memory_space<vmem>>, vector<128x128xf32>
    %c16_11 = arith.constant 16 : index
    %c0_12 = arith.constant 0 : index
    %16 = vector.load %arg3[%c16_11, %c0_12] : memref<32x128xf32, #tpu.memory_space<vmem>>, vector<1x128xf32>
    %cst_13 = arith.constant dense<0.000000e+00> : vector<8x128xf32>
    %17 = tpu.matmul %14, %15, %cst_13 {dimension_numbers = #tpu.dot_dimension_numbers<[1], [0], [0], [1], [0, 0, 1, 1], [], []>} : vector<8x128xf32>, vector<128x128xf32>, vector<8x128xf32> -> vector<8x128xf32>
    %18 = vector.broadcast %16 : vector<1x128xf32> to vector<8x128xf32>
    %19 = arith.addf %17, %18 : vector<8x128xf32>
    %cst_14 = arith.constant 0.000000e+00 : f32
    %20 = vector.broadcast %cst_14 : f32 to vector<8x128xf32>
    %21 = arith.maximumf %19, %20 : vector<8x128xf32>
    %c272 = arith.constant 272 : index
    %c0_15 = arith.constant 0 : index
    %22 = vector.load %arg2[%c272, %c0_15] : memref<400x128xf32, #tpu.memory_space<vmem>>, vector<128x128xf32>
    %c24 = arith.constant 24 : index
    %c0_16 = arith.constant 0 : index
    %23 = vector.load %arg3[%c24, %c0_16] : memref<32x128xf32, #tpu.memory_space<vmem>>, vector<1x128xf32>
    %cst_17 = arith.constant dense<0.000000e+00> : vector<8x128xf32>
    %24 = tpu.matmul %21, %22, %cst_17 {dimension_numbers = #tpu.dot_dimension_numbers<[1], [0], [0], [1], [0, 0, 1, 1], [], []>} : vector<8x128xf32>, vector<128x128xf32>, vector<8x128xf32> -> vector<8x128xf32>
    %25 = vector.broadcast %23 : vector<1x128xf32> to vector<8x128xf32>
    %26 = arith.addf %24, %25 : vector<8x128xf32>
    %cst_18 = arith.constant dense<0xFF800000> : vector<8xf32>
    %27 = vector.multi_reduction <maximumf>, %26, %cst_18 [1] : vector<8x128xf32> to vector<8xf32>
    %28 = vector.shape_cast %27 : vector<8xf32> to vector<8x1xf32>
    %29 = vector.broadcast %28 : vector<8x1xf32> to vector<8x128xf32>
    %30 = arith.subf %26, %29 : vector<8x128xf32>
    %31 = math.exp %30 : vector<8x128xf32>
    %cst_19 = arith.constant dense<0.000000e+00> : vector<8xf32>
    %32 = vector.multi_reduction <add>, %31, %cst_19 [1] : vector<8x128xf32> to vector<8xf32>
    %33 = vector.shape_cast %32 : vector<8xf32> to vector<8x1xf32>
    %34 = vector.broadcast %33 : vector<8x1xf32> to vector<8x128xf32>
    %35 = arith.divf %31, %34 : vector<8x128xf32>
    %c0_20 = arith.constant 0 : index
    %c0_21 = arith.constant 0 : index
    %36 = vector.load %arg4[%c0_20, %c0_21] : memref<8x128xf32, #tpu.memory_space<vmem>>, vector<8x128xf32>
    tpu.vector_store %arg4[%c0_20, %c0_21], %35 {strides = array<i32>} : memref<8x128xf32, #tpu.memory_space<vmem>>, vector<8x128xf32>,
    return
  }
  func.func @transform_0(%arg0: i32) -> (i32, i32) {
    %c0_i32 = arith.constant 0 : i32
    %c0_i32_0 = arith.constant 0 : i32
    return %arg0, %c0_i32 : i32, i32
  }
  func.func @transform_1(%arg0: i32) -> (i32, i32) {
    %c0_i32 = arith.constant 0 : i32
    %c0_i32_0 = arith.constant 0 : i32
    %c0_i32_1 = arith.constant 0 : i32
    return %c0_i32, %c0_i32_0 : i32, i32
  }
  func.func @transform_2(%arg0: i32) -> (i32, i32) {
    %c0_i32 = arith.constant 0 : i32
    %c0_i32_0 = arith.constant 0 : i32
    %c0_i32_1 = arith.constant 0 : i32
    return %c0_i32, %c0_i32_0 : i32, i32
  }
  func.func @transform_3(%arg0: i32) -> (i32, i32) {
    %c0_i32 = arith.constant 0 : i32
    %c0_i32_0 = arith.constant 0 : i32
    return %arg0, %c0_i32 : i32, i32
  }
}

</mosaic_0001>

<llo_original>
// kernel: actor_forward.1
$region0: #{actor_forward.1}
  #allocation0 [shape = 'u32[]', space=smem, size = 0x4, offset = 0x4, fixed_abs, tag = 'smem constant byte address 0x4 - core index']
  #allocation1 [shape = 'u32[144,128]{1,0:T(1,128)}', space=vmem, size = 0x12000, scoped, tag = 'internal scratch']
  %s0 = inlined_call_operand.hbm [shape: f32[8,16], index: 0, kind: input, shape index: {}]
  %s1 = inlined_call_operand.hbm [shape: f32[400,128], index: 1, kind: input, shape index: {}]
  %s2 = inlined_call_operand.hbm [shape: f32[32,128], index: 2, kind: input, shape index: {}]
  %s3 = inlined_call_operand.vmem [shape: f32[8,128], index: 3, kind: output, shape index: {}]
  %s4 = sld [smem:[#allocation0]]
  $region34: #{actor_forward.1} parent=0
    _
  %s6 = ssub.s32 1, %s4
  %s7 = scalar_select 0, %s6, %s4
  $region1: #{actor_forward.1} parent=0
    #allocation2 [shape = 'u8[4096]{0}', space=vmem, size = 0x1000, scoped, tag = 'input window, operand 0, single buffered']
    #allocation3 [shape = 's32[1]{0}', space=sflag, size = 0x4, scoped, tag = 'scoped memory for actor_forward.1']
    #allocation4 [shape = 'u8[204800]{0}', space=vmem, size = 0x32000, scoped, tag = 'input window, operand 1, single buffered']
    #allocation5 [shape = 's32[1]{0}', space=sflag, size = 0x4, scoped, tag = 'scoped memory for actor_forward.1']
    #allocation6 [shape = 'u8[16384]{0}', space=vmem, size = 0x4000, scoped, tag = 'input window, operand 2, single buffered']
    %8 = vsyncpa [#allocation3], 0
    %9 = vsyncpa [#allocation5], 0
    // Predicated region
    $region2: #{actor_forward.1} parent=1 // pred_check
      _
    $region3: #{actor_forward.1} parent=1 // pred_check_branch
      %11 = sbr.rel (0) target = $region5
    $region4: #{actor_forward.1} parent=1 // pred_region
      %s13 = ssub.s32 128, 128
      %14 = vsyncadd [#allocation3], %s13
      %s16 = sshll.u32 [#allocation2], 4
      %s17 = int_to_ptr.vmem [resolvable:$true] %s16
      %19 = dma.hbm_to_vmem [thread:$0]  %s0, 128, %s17, [#allocation3]
    $region5: #{actor_forward.1} parent=1 // pred_fallthru
      _
    // Predicated region
    $region6: #{actor_forward.1} parent=1 // pred_check
      _
    $region7: #{actor_forward.1} parent=1 // pred_check_branch
      %21 = sbr.rel (0) target = $region9
    $region8: #{actor_forward.1} parent=1 // pred_region
      %s23 = ssub.s32 6400, 6400
      %24 = vsyncadd [#allocation5], %s23
      %s25 = sshll.u32 [#allocation4], 4
      %s26 = int_to_ptr.vmem [resolvable:$true] %s25
      %31 = dma.hbm_to_vmem [thread:$0]  %s1, 6400, %s26, [#allocation5], 128, 128, 8
    $region9: #{actor_forward.1} parent=1 // pred_fallthru
      _
    // Predicated region
    $region10: #{actor_forward.1} parent=1 // pred_check
      _
    $region11: #{actor_forward.1} parent=1 // pred_check_branch
      %33 = sbr.rel (0) target = $region13
    $region12: #{actor_forward.1} parent=1 // pred_region
      %s35 = ssub.s32 512, 512
      %36 = vsyncadd [#allocation5], %s35
      %s37 = sshll.u32 [#allocation6], 4
      %s38 = int_to_ptr.vmem [resolvable:$true] %s37
      %43 = dma.hbm_to_vmem [thread:$0]  %s2, 512, %s38, [#allocation5], 128, 128, 8
    $region13: #{actor_forward.1} parent=1 // pred_fallthru
      _
    // Predicated region
    $region14: #{actor_forward.1} parent=1 // pred_check
      _
    $region15: #{actor_forward.1} parent=1 // pred_check_branch
      %45 = sbr.rel (0) target = $region17
    $region16: #{actor_forward.1} parent=1 // pred_region
      %46 = dma.done [#allocation3], 128
    $region17: #{actor_forward.1} parent=1 // pred_fallthru
      _
    // Predicated region
    $region18: #{actor_forward.1} parent=1 // pred_check
      _
    $region19: #{actor_forward.1} parent=1 // pred_check_branch
      %48 = sbr.rel (0) target = $region21
    $region20: #{actor_forward.1} parent=1 // pred_region
      %49 = dma.done [#allocation5], 6400
    $region21: #{actor_forward.1} parent=1 // pred_fallthru
      _
    // Predicated region
    $region22: #{actor_forward.1} parent=1 // pred_check
      _
    $region23: #{actor_forward.1} parent=1 // pred_check_branch
      %51 = sbr.rel (0) target = $region25
    $region24: #{actor_forward.1} parent=1 // pred_region
      %52 = dma.done [#allocation5], 512
    $region25: #{actor_forward.1} parent=1 // pred_fallthru
      _
    %v53 = vld [vmem:[#allocation2] sm:$0xff]
    %v54 = vld [vmem:[#allocation4] sm:$0xff]
    %v55 = vld [vmem:[#allocation4 + $0x8] sm:$0xff]
    %v56 = vld [vmem:[#allocation6] sm:$0x1]
    %v57 = vlaneseq
    %v58 = vshrl.u32 %v57, 7
    %v59 = vsub.s32 0, %v58
    %v60 = vrot.slane %v56, %v59
    %vm61 = vcmask 130048
    %v63 = vsel %vm61, %v53, 0
    %65 = vmatprep.subr.mxu0 0.0
    %66 = vmatpush1.msra.mxu0 %v54
    %67 = vmatprep.subr.mxu0 0.0
    %68 = vmatpush1.msra.mxu0 %v55
    %69 = vmatprep.subr.mxu0 0.0
    %70 = vmatpush1.msra.mxu0 0.0
    %71 = vmatprep.subr.mxu0 0.0
    %72 = vmatpush1.msra.mxu0 0.0
    %73 = vmatprep.subr.mxu0 0.0
    %74 = vmatpush1.msra.mxu0 0.0
    %75 = vmatprep.subr.mxu0 0.0
    %76 = vmatpush1.msra.mxu0 0.0
    %77 = vmatprep.subr.mxu0 0.0
    %78 = vmatpush1.msra.mxu0 0.0
    %79 = vmatprep.subr.mxu0 0.0
    %80 = vmatpush1.msra.mxu0 0.0
    %81 = vmatprep.subr.mxu0 0.0
    %82 = vmatpush1.msra.mxu0 0.0
    %83 = vmatprep.subr.mxu0 0.0
    %84 = vmatpush1.msra.mxu0 0.0
    %85 = vmatprep.subr.mxu0 0.0
    %86 = vmatpush1.msra.mxu0 0.0
    %87 = vmatprep.subr.mxu0 0.0
    %88 = vmatpush1.msra.mxu0 0.0
    %89 = vmatprep.subr.mxu0 0.0
    %90 = vmatpush1.msra.mxu0 0.0
    %91 = vmatprep.subr.mxu0 0.0
    %92 = vmatpush1.msra.mxu0 0.0
    %93 = vmatprep.subr.mxu0 0.0
    %94 = vmatpush1.msra.mxu0 0.0
    %95 = vmatprep.subr.mxu0 0.0
    %96 = vmatpush1.msra.mxu0 0.0
    %97 = vmatprep.subr.mxu0 0.0
    %98 = vmatpush1.msra.mxu0 0.0
    %99 = vmatprep.subr.mxu0 0.0
    %100 = vmatpush1.msra.mxu0 0.0
    %101 = vmatprep.subr.mxu0 0.0
    %102 = vmatpush1.msra.mxu0 0.0
    %103 = vmatprep.subr.mxu0 0.0
    %104 = vmatpush1.msra.mxu0 0.0
    %105 = vmatprep.subr.mxu0 0.0
    %106 = vmatpush1.msra.mxu0 0.0
    %107 = vmatprep.subr.mxu0 0.0
    %108 = vmatpush1.msra.mxu0 0.0
    %109 = vmatprep.subr.mxu0 0.0
    %110 = vmatpush1.msra.mxu0 0.0
    %111 = vmatprep.subr.mxu0 0.0
    %112 = vmatpush1.msra.mxu0 0.0
    %113 = vmatprep.subr.mxu0 0.0
    %114 = vmatpush1.msra.mxu0 0.0
    %115 = vmatprep.subr.mxu0 0.0
    %116 = vmatpush1.msra.mxu0 0.0
    %117 = vmatprep.subr.mxu0 0.0
    %118 = vmatpush1.msra.mxu0 0.0
    %119 = vmatprep.subr.mxu0 0.0
    %120 = vmatpush1.msra.mxu0 0.0
    %121 = vmatprep.subr.mxu0 0.0
    %122 = vmatpush1.msra.mxu0 0.0
    %123 = vmatprep.subr.mxu0 0.0
    %124 = vmatpush1.msra.mxu0 0.0
    %125 = vmatprep.subr.mxu0 0.0
    %126 = vmatpush1.msra.mxu0 0.0
    %127 = vmatprep.subr.mxu0 0.0
    %128 = vmatpush1.msra.mxu0 0.0
    %129 = vmatprep.mubr.f32.mxu0 0.0
    %130 = vmatmul.mubr.f32.gmra.mrb[0].mxu0 %v63
    %v131 = vpop.f32.mrb[0].mxu0
    %v132 = vadd.f32 %v60, %v131
    %v133 = vpop.f32.mrb[0].mxu0
    %134 = vdwg.mxu0
    %v135 = vmax.f32 %v132, 0.0
    %v136 = vld [vmem:[#allocation4 + $0x10] sm:$0xff]
    %v137 = vld [vmem:[#allocation4 + $0x18] sm:$0xff]
    %v138 = vld [vmem:[#allocation4 + $0x20] sm:$0xff]
    %v139 = vld [vmem:[#allocation4 + $0x28] sm:$0xff]
    %v140 = vld [vmem:[#allocation4 + $0x30] sm:$0xff]
    %v141 = vld [vmem:[#allocation4 + $0x38] sm:$0xff]
    %v142 = vld [vmem:[#allocation4 + $0x40] sm:$0xff]
    %v143 = vld [vmem:[#allocation4 + $0x48] sm:$0xff]
    %v144 = vld [vmem:[#allocation4 + $0x50] sm:$0xff]
    %v145 = vld [vmem:[#allocation4 + $0x58] sm:$0xff]
    %v146 = vld [vmem:[#allocation4 + $0x60] sm:$0xff]
    %v147 = vld [vmem:[#allocation4 + $0x68] sm:$0xff]
    %v148 = vld [vmem:[#allocation4 + $0x70] sm:$0xff]
    %v149 = vld [vmem:[#allocation4 + $0x78] sm:$0xff]
    %v150 = vld [vmem:[#allocation4 + $0x80] sm:$0xff]
    %v151 = vld [vmem:[#allocation4 + $0x88] sm:$0xff]
    %v152 = vld [vmem:[#allocation6 + $0x8] sm:$0x1]
    %v153 = vlaneseq
    %v154 = vshrl.u32 %v153, 7
    %v155 = vsub.s32 0, %v154
    %v156 = vrot.slane %v152, %v155
    %157 = vmatprep.subr.mxu0 0.0
    %158 = vmatpush1.msra.mxu0 %v136
    %159 = vmatprep.subr.mxu0 0.0
    %160 = vmatpush1.msra.mxu0 %v137
    %161 = vmatprep.subr.mxu0 0.0
    %162 = vmatpush1.msra.mxu0 %v138
    %163 = vmatprep.subr.mxu0 0.0
    %164 = vmatpush1.msra.mxu0 %v139
    %165 = vmatprep.subr.mxu0 0.0
    %166 = vmatpush1.msra.mxu0 %v140
    %167 = vmatprep.subr.mxu0 0.0
    %168 = vmatpush1.msra.mxu0 %v141
    %169 = vmatprep.subr.mxu0 0.0
    %170 = vmatpush1.msra.mxu0 %v142
    %171 = vmatprep.subr.mxu0 0.0
    %172 = vmatpush1.msra.mxu0 %v143
    %173 = vmatprep.subr.mxu0 0.0
    %174 = vmatpush1.msra.mxu0 %v144
    %175 = vmatprep.subr.mxu0 0.0
    %176 = vmatpush1.msra.mxu0 %v145
    %177 = vmatprep.subr.mxu0 0.0
    %178 = vmatpush1.msra.mxu0 %v146
    %179 = vmatprep.subr.mxu0 0.0
    %180 = vmatpush1.msra.mxu0 %v147
    %181 = vmatprep.subr.mxu0 0.0
    %182 = vmatpush1.msra.mxu0 %v148
    %183 = vmatprep.subr.mxu0 0.0
    %184 = vmatpush1.msra.mxu0 %v149
    %185 = vmatprep.subr.mxu0 0.0
    %186 = vmatpush1.msra.mxu0 %v150
    %187 = vmatprep.subr.mxu0 0.0
    %188 = vmatpush1.msra.mxu0 %v151
    %189 = vmatprep.subr.mxu0 0.0
    %190 = vmatpush1.msra.mxu0 0.0
    %191 = vmatprep.subr.mxu0 0.0
    %192 = vmatpush1.msra.mxu0 0.0
    %193 = vmatprep.subr.mxu0 0.0
    %194 = vmatpush1.msra.mxu0 0.0
    %195 = vmatprep.subr.mxu0 0.0
    %196 = vmatpush1.msra.mxu0 0.0
    %197 = vmatprep.subr.mxu0 0.0
    %198 = vmatpush1.msra.mxu0 0.0
    %199 = vmatprep.subr.mxu0 0.0
    %200 = vmatpush1.msra.mxu0 0.0
    %201 = vmatprep.subr.mxu0 0.0
    %202 = vmatpush1.msra.mxu0 0.0
    %203 = vmatprep.subr.mxu0 0.0
    %204 = vmatpush1.msra.mxu0 0.0
    %205 = vmatprep.subr.mxu0 0.0
    %206 = vmatpush1.msra.mxu0 0.0
    %207 = vmatprep.subr.mxu0 0.0
    %208 = vmatpush1.msra.mxu0 0.0
    %209 = vmatprep.subr.mxu0 0.0
    %210 = vmatpush1.msra.mxu0 0.0
    %211 = vmatprep.subr.mxu0 0.0
    %212 = vmatpush1.msra.mxu0 0.0
    %213 = vmatprep.subr.mxu0 0.0
    %214 = vmatpush1.msra.mxu0 0.0
    %215 = vmatprep.subr.mxu0 0.0
    %216 = vmatpush1.msra.mxu0 0.0
    %217 = vmatprep.subr.mxu0 0.0
    %218 = vmatpush1.msra.mxu0 0.0
    %219 = vmatprep.subr.mxu0 0.0
    %220 = vmatpush1.msra.mxu0 0.0
    %221 = vmatprep.mubr.f32.mxu0 0.0
    %222 = vmatmul.mubr.f32.gmra.mrb[0].mxu0 %v135
    %v223 = vpop.f32.mrb[0].mxu0
    %v224 = vadd.f32 %v156, %v223
    %v225 = vpop.f32.mrb[0].mxu0
    %226 = vdwg.mxu0
    %v227 = vmax.f32 %v224, 0.0
    %v228 = vld [vmem:[#allocation4 + $0x90] sm:$0xff]
    %v229 = vld [vmem:[#allocation4 + $0x98] sm:$0xff]
    %v230 = vld [vmem:[#allocation4 + $0xa0] sm:$0xff]
    %v231 = vld [vmem:[#allocation4 + $0xa8] sm:$0xff]
    %v232 = vld [vmem:[#allocation4 + $0xb0] sm:$0xff]
    %v233 = vld [vmem:[#allocation4 + $0xb8] sm:$0xff]
    %v234 = vld [vmem:[#allocation4 + $0xc0] sm:$0xff]
    %v235 = vld [vmem:[#allocation4 + $0xc8] sm:$0xff]
    %v236 = vld [vmem:[#allocation4 + $0xd0] sm:$0xff]
    %v237 = vld [vmem:[#allocation4 + $0xd8] sm:$0xff]
    %v238 = vld [vmem:[#allocation4 + $0xe0] sm:$0xff]
    %v239 = vld [vmem:[#allocation4 + $0xe8] sm:$0xff]
    %v240 = vld [vmem:[#allocation4 + $0xf0] sm:$0xff]
    %v241 = vld [vmem:[#allocation4 + $0xf8] sm:$0xff]
    %v242 = vld [vmem:[#allocation4 + $0x100] sm:$0xff]
    %v243 = vld [vmem:[#allocation4 + $0x108] sm:$0xff]
    %v244 = vld [vmem:[#allocation6 + $0x10] sm:$0x1]
    %v245 = vlaneseq
    %v246 = vshrl.u32 %v245, 7
    %v247 = vsub.s32 0, %v246
    %v248 = vrot.slane %v244, %v247
    %249 = vmatprep.subr.mxu0 0.0
    %250 = vmatpush1.msra.mxu0 %v228
    %251 = vmatprep.subr.mxu0 0.0
    %252 = vmatpush1.msra.mxu0 %v229
    %253 = vmatprep.subr.mxu0 0.0
    %254 = vmatpush1.msra.mxu0 %v230
    %255 = vmatprep.subr.mxu0 0.0
    %256 = vmatpush1.msra.mxu0 %v231
    %257 = vmatprep.subr.mxu0 0.0
    %258 = vmatpush1.msra.mxu0 %v232
    %259 = vmatprep.subr.mxu0 0.0
    %260 = vmatpush1.msra.mxu0 %v233
    %261 = vmatprep.subr.mxu0 0.0
    %262 = vmatpush1.msra.mxu0 %v234
    %263 = vmatprep.subr.mxu0 0.0
    %264 = vmatpush1.msra.mxu0 %v235
    %265 = vmatprep.subr.mxu0 0.0
    %266 = vmatpush1.msra.mxu0 %v236
    %267 = vmatprep.subr.mxu0 0.0
    %268 = vmatpush1.msra.mxu0 %v237
    %269 = vmatprep.subr.mxu0 0.0
    %270 = vmatpush1.msra.mxu0 %v238
    %271 = vmatprep.subr.mxu0 0.0
    %272 = vmatpush1.msra.mxu0 %v239
    %273 = vmatprep.subr.mxu0 0.0
    %274 = vmatpush1.msra.mxu0 %v240
    %275 = vmatprep.subr.mxu0 0.0
    %276 = vmatpush1.msra.mxu0 %v241
    %277 = vmatprep.subr.mxu0 0.0
    %278 = vmatpush1.msra.mxu0 %v242
    %279 = vmatprep.subr.mxu0 0.0
    %280 = vmatpush1.msra.mxu0 %v243
    %281 = vmatprep.subr.mxu0 0.0
    %282 = vmatpush1.msra.mxu0 0.0
    %283 = vmatprep.subr.mxu0 0.0
    %284 = vmatpush1.msra.mxu0 0.0
    %285 = vmatprep.subr.mxu0 0.0
    %286 = vmatpush1.msra.mxu0 0.0
    %287 = vmatprep.subr.mxu0 0.0
    %288 = vmatpush1.msra.mxu0 0.0
    %289 = vmatprep.subr.mxu0 0.0
    %290 = vmatpush1.msra.mxu0 0.0
    %291 = vmatprep.subr.mxu0 0.0
    %292 = vmatpush1.msra.mxu0 0.0
    %293 = vmatprep.subr.mxu0 0.0
    %294 = vmatpush1.msra.mxu0 0.0
    %295 = vmatprep.subr.mxu0 0.0
    %296 = vmatpush1.msra.mxu0 0.0
    %297 = vmatprep.subr.mxu0 0.0
    %298 = vmatpush1.msra.mxu0 0.0
    %299 = vmatprep.subr.mxu0 0.0
    %300 = vmatpush1.msra.mxu0 0.0
    %301 = vmatprep.subr.mxu0 0.0
    %302 = vmatpush1.msra.mxu0 0.0
    %303 = vmatprep.subr.mxu0 0.0
    %304 = vmatpush1.msra.mxu0 0.0
    %305 = vmatprep.subr.mxu0 0.0
    %306 = vmatpush1.msra.mxu0 0.0
    %307 = vmatprep.subr.mxu0 0.0
    %308 = vmatpush1.msra.mxu0 0.0
    %309 = vmatprep.subr.mxu0 0.0
    %310 = vmatpush1.msra.mxu0 0.0
    %311 = vmatprep.subr.mxu0 0.0
    %312 = vmatpush1.msra.mxu0 0.0
    %313 = vmatprep.mubr.f32.mxu0 0.0
    %314 = vmatmul.mubr.f32.gmra.mrb[0].mxu0 %v227
    %v315 = vpop.f32.mrb[0].mxu0
    %v316 = vadd.f32 %v248, %v315
    %v317 = vpop.f32.mrb[0].mxu0
    %318 = vdwg.mxu0
    %v319 = vmax.f32 %v316, 0.0
    %v320 = vld [vmem:[#allocation4 + $0x110] sm:$0xff]
    %v321 = vld [vmem:[#allocation4 + $0x118] sm:$0xff]
    %v322 = vld [vmem:[#allocation4 + $0x120] sm:$0xff]
    %v323 = vld [vmem:[#allocation4 + $0x128] sm:$0xff]
    %v324 = vld [vmem:[#allocation4 + $0x130] sm:$0xff]
    %v325 = vld [vmem:[#allocation4 + $0x138] sm:$0xff]
    %v326 = vld [vmem:[#allocation4 + $0x140] sm:$0xff]
    %v327 = vld [vmem:[#allocation4 + $0x148] sm:$0xff]
    %v328 = vld [vmem:[#allocation4 + $0x150] sm:$0xff]
    %v329 = vld [vmem:[#allocation4 + $0x158] sm:$0xff]
    %v330 = vld [vmem:[#allocation4 + $0x160] sm:$0xff]
    %v331 = vld [vmem:[#allocation4 + $0x168] sm:$0xff]
    %v332 = vld [vmem:[#allocation4 + $0x170] sm:$0xff]
    %v333 = vld [vmem:[#allocation4 + $0x178] sm:$0xff]
    %v334 = vld [vmem:[#allocation4 + $0x180] sm:$0xff]
    %v335 = vld [vmem:[#allocation4 + $0x188] sm:$0xff]
    %v336 = vld [vmem:[#allocation6 + $0x18] sm:$0x1]
    %v337 = vlaneseq
    %v338 = vshrl.u32 %v337, 7
    %v339 = vsub.s32 0, %v338
    %v340 = vrot.slane %v336, %v339
    %341 = vmatprep.subr.mxu0 0.0
    %342 = vmatpush1.msra.mxu0 %v320
    %343 = vmatprep.subr.mxu0 0.0
    %344 = vmatpush1.msra.mxu0 %v321
    %345 = vmatprep.subr.mxu0 0.0
    %346 = vmatpush1.msra.mxu0 %v322
    %347 = vmatprep.subr.mxu0 0.0
    %348 = vmatpush1.msra.mxu0 %v323
    %349 = vmatprep.subr.mxu0 0.0
    %350 = vmatpush1.msra.mxu0 %v324
    %351 = vmatprep.subr.mxu0 0.0
    %352 = vmatpush1.msra.mxu0 %v325
    %353 = vmatprep.subr.mxu0 0.0
    %354 = vmatpush1.msra.mxu0 %v326
    %355 = vmatprep.subr.mxu0 0.0
    %356 = vmatpush1.msra.mxu0 %v327
    %357 = vmatprep.subr.mxu0 0.0
    %358 = vmatpush1.msra.mxu0 %v328
    %359 = vmatprep.subr.mxu0 0.0
    %360 = vmatpush1.msra.mxu0 %v329
    %361 = vmatprep.subr.mxu0 0.0
    %362 = vmatpush1.msra.mxu0 %v330
    %363 = vmatprep.subr.mxu0 0.0
    %364 = vmatpush1.msra.mxu0 %v331
    %365 = vmatprep.subr.mxu0 0.0
    %366 = vmatpush1.msra.mxu0 %v332
    %367 = vmatprep.subr.mxu0 0.0
    %368 = vmatpush1.msra.mxu0 %v333
    %369 = vmatprep.subr.mxu0 0.0
    %370 = vmatpush1.msra.mxu0 %v334
    %371 = vmatprep.subr.mxu0 0.0
    %372 = vmatpush1.msra.mxu0 %v335
    %373 = vmatprep.subr.mxu0 0.0
    %374 = vmatpush1.msra.mxu0 0.0
    %375 = vmatprep.subr.mxu0 0.0
    %376 = vmatpush1.msra.mxu0 0.0
    %377 = vmatprep.subr.mxu0 0.0
    %378 = vmatpush1.msra.mxu0 0.0
    %379 = vmatprep.subr.mxu0 0.0
    %380 = vmatpush1.msra.mxu0 0.0
    %381 = vmatprep.subr.mxu0 0.0
    %382 = vmatpush1.msra.mxu0 0.0
    %383 = vmatprep.subr.mxu0 0.0
    %384 = vmatpush1.msra.mxu0 0.0
    %385 = vmatprep.subr.mxu0 0.0
    %386 = vmatpush1.msra.mxu0 0.0
    %387 = vmatprep.subr.mxu0 0.0
    %388 = vmatpush1.msra.mxu0 0.0
    %389 = vmatprep.subr.mxu0 0.0
    %390 = vmatpush1.msra.mxu0 0.0
    %391 = vmatprep.subr.mxu0 0.0
    %392 = vmatpush1.msra.mxu0 0.0
    %393 = vmatprep.subr.mxu0 0.0
    %394 = vmatpush1.msra.mxu0 0.0
    %395 = vmatprep.subr.mxu0 0.0
    %396 = vmatpush1.msra.mxu0 0.0
    %397 = vmatprep.subr.mxu0 0.0
    %398 = vmatpush1.msra.mxu0 0.0
    %399 = vmatprep.subr.mxu0 0.0
    %400 = vmatpush1.msra.mxu0 0.0
    %401 = vmatprep.subr.mxu0 0.0
    %402 = vmatpush1.msra.mxu0 0.0
    %403 = vmatprep.subr.mxu0 0.0
    %404 = vmatpush1.msra.mxu0 0.0
    %405 = vmatprep.mubr.f32.mxu0 0.0
    %406 = vmatmul.mubr.f32.gmra.mrb[0].mxu0 %v319
    %v407 = vpop.f32.mrb[0].mxu0
    %v408 = vadd.f32 %v340, %v407
    %v409 = vpop.f32.mrb[0].mxu0
    %410 = vdwg.mxu0
    %411 = vmax.xlane.f32.xlu0 %v408
    %v412 = vpop.xlane.xlu0 %411
    %v413 = vsub.f32 %v408, %v412
    %v414 = vmul.f32 %v413, 1.442695
    %v415 = vpow.pop %v414
    %416 = vadd.xlane.f32.xlu0 %v415
    %v417 = vpop.xlane.xlu0 %416
    %v418 = vrcp.pop %v417
    %v419 = vmul.f32 %v415, %v418
    %420 = vst [vmem:[%s3] sm:$0xff] %v419
    // Predicated region
    $region26: #{actor_forward.1} parent=1 // pred_check
      _
    $region27: #{actor_forward.1} parent=1 // pred_check_branch
      %422 = sbr.rel (0) target = $region29
    $region28: #{actor_forward.1} parent=1 // pred_region
      _
    $region29: #{actor_forward.1} parent=1 // pred_fallthru
      _
    // Predicated region
    $region30: #{actor_forward.1} parent=1 // pred_check
      _
    $region31: #{actor_forward.1} parent=1 // pred_check_branch
      %424 = sbr.rel (0) target = $region33
    $region32: #{actor_forward.1} parent=1 // pred_region
      _
    $region33: #{actor_forward.1} parent=1 // pred_fallthru
      _
    %425 = vsyncpa [#allocation3], 1
    %426 = vsyncpa [#allocation5], 1

</llo_original>
